<compile_context>
chip_gen: v7x
topology: tpu7x:2x2x1
jax: 0.10.0
libtpu: 0.0.40
codegen_flags: <defaults>
</compile_context>

<pallas_src>
import functools
import math

import jax
import jax.numpy as jnp
import numpy as np
from jax.experimental import pallas as pl
from jax.experimental.pallas import tpu as pltpu


# ---------------------------------------------------------------------------
# helpers
# ---------------------------------------------------------------------------
def _pick_tile(total, limit, multiple):
    """Largest t <= limit with t % multiple == 0 and total % t == 0 (falls back to total)."""
    limit = max(multiple, min(limit, total))
    t = (limit // multiple) * multiple
    while t >= multiple:
        if total % t == 0:
            return t
        t -= multiple
    return total


def _vmem_limit_bytes():
    # Per-generation scoped-VMEM limit: ~7/8 of physical capacity
    # (~112 MiB on 128 MiB v5e/v6e, ~56 MiB on 64 MiB v7x), conservative fallback.
    try:
        info = pltpu.get_tpu_info()
        cap = getattr(info, "vmem_capacity_bytes", None) or 64 * 1024 * 1024
    except Exception:
        cap = 64 * 1024 * 1024
    return int(min(cap * 7 // 8, 120 * 1024 * 1024))


# ---------------------------------------------------------------------------
# Kernel 0: LayerNorm + modulation  ->  x_mod (bf16)
# ---------------------------------------------------------------------------
def _mod_kernel(x_ref, shift_ref, scale_ref, o_ref):
    x = x_ref[0]                                        # (TL, H) f32
    mean = jnp.mean(x, axis=-1, keepdims=True)
    xc = x - mean
    var = jnp.mean(xc * xc, axis=-1, keepdims=True)     # mean-subtracted (no cancellation)
    xn = xc * jax.lax.rsqrt(var + 1e-6)
    o_ref[0] = (shift_ref[0] + (1.0 + scale_ref[0]) * xn).astype(o_ref.dtype)


# ---------------------------------------------------------------------------
# Kernel 1: linear1 qkv columns (streamed W1 slabs) + QK-RMSNorm + RoPE
# ---------------------------------------------------------------------------
def _lin1_qkv_kernel(xm_ref, w_ref, b_ref, ns_ref, cs_ref, co_ref, o_ref, *,
                     head_dim, v_tile_start):
    n = pl.program_id(2)
    D = head_dim
    y = (jnp.dot(xm_ref[0], w_ref[...], preferred_element_type=jnp.float32)
         + b_ref[...])                                  # (TR, TN) f32
    heads_per_tile = y.shape[1] // D

    @pl.when(n < v_tile_start)                          # q / k columns: RMSNorm + RoPE
    def _():
        ns = ns_ref[0]                                  # (1, D) q_norm*sm_scale or k_norm
        cs = cs_ref[...]                                # (TR, D) rope same-slot coeffs
        co = co_ref[...]                                # (TR, D) rope partner coeffs
        for h in range(heads_per_tile):                 # static, lane-aligned head slices
            t = y[:, h * D:(h + 1) * D]
            t = t * jax.lax.rsqrt(jnp.mean(t * t, axis=-1, keepdims=True) + 1e-6) * ns
            t = cs * t + co * pltpu.roll(t, shift=D // 2, axis=1)
            o_ref[0, :, h * D:(h + 1) * D] = t.astype(o_ref.dtype)

    @pl.when(n >= v_tile_start)                         # v columns: pass through
    def _():
        o_ref[0] = y.astype(o_ref.dtype)


# ---------------------------------------------------------------------------
# Kernel 2: linear1 mlp columns (streamed W1 slabs) + tanh-GELU
# ---------------------------------------------------------------------------
def _lin1_mlp_kernel(xm_ref, w_ref, b_ref, o_ref):
    y = (jnp.dot(xm_ref[0], w_ref[...], preferred_element_type=jnp.float32)
         + b_ref[...])
    c = math.sqrt(2.0 / math.pi)
    o_ref[0] = (0.5 * y * (1.0 + jnp.tanh(c * (y + 0.044715 * y * y * y)))
                ).astype(o_ref.dtype)


# ---------------------------------------------------------------------------
# Kernel 3: flash attention over KV tiles (q pre-scaled / normed / roped)
# ---------------------------------------------------------------------------
def _attn_kernel(q_ref, k_ref, v_ref, o_ref, acc_ref, m_ref, l_ref, *,
                 num_heads, head_dim):
    D = head_dim
    kv = pl.program_id(2)

    @pl.when(kv == 0)
    def _():
        acc_ref[...] = jnp.zeros(acc_ref.shape, jnp.float32)
        m_ref[...] = jnp.full(m_ref.shape, -jnp.inf, jnp.float32)
        l_ref[...] = jnp.zeros(l_ref.shape, jnp.float32)

    q = q_ref[0]                                        # (TQ, H) bf16
    k = k_ref[0]                                        # (TK, H) bf16
    v = v_ref[0]                                        # (TK, H) bf16
    # TODO(synk): at production num_heads (24) switch to lax.fori_loop(unroll=2..4)
    #             with pl.ds/pl.multiple_of head slices to bound vreg live ranges.
    for h in range(num_heads):
        qh = q[:, h * D:(h + 1) * D]
        kh = k[:, h * D:(h + 1) * D]
        vh = v[:, h * D:(h + 1) * D]
        # TODO(synk): if the bundle shows the XLU saturated, emit k pre-transposed
        #             (D-major) from kernel 1 to avoid this implicit per-tile transpose.
        s = jax.lax.dot_general(qh, kh, (((1,), (1,)), ((), ())),
                                preferred_element_type=jnp.float32)     # (TQ, TK)
        m_prev = m_ref[h]
        m_new = jnp.maximum(m_prev, jnp.max(s, axis=-1, keepdims=True))
        alpha = jnp.exp(m_prev - m_new)
        p = jnp.exp(s - m_new)
        l_ref[h] = alpha * l_ref[h] + jnp.sum(p, axis=-1, keepdims=True)
        acc_ref[:, h * D:(h + 1) * D] = (
            alpha * acc_ref[:, h * D:(h + 1) * D]
            + jnp.dot(p.astype(jnp.bfloat16), vh, preferred_element_type=jnp.float32))
        m_ref[h] = m_new

    @pl.when(kv == pl.num_programs(2) - 1)
    def _():
        # Fold 1/l into the bf16 cast and write straight to the output (no f32
        # accumulator write-back + reload).
        for h in range(num_heads):
            inv_l = pl.reciprocal(l_ref[h], approx=True)
            o_ref[0, :, h * D:(h + 1) * D] = (
                acc_ref[:, h * D:(h + 1) * D] * inv_l).astype(o_ref.dtype)


# ---------------------------------------------------------------------------
# Kernel 4: split linear2 with tiled contraction + gated residual
# ---------------------------------------------------------------------------
def _lin2_kernel(x_ref, gate_ref, attn_ref, g_ref, w2a_ref, w2m_ref, b2_ref, o_ref,
                 acc_ref, *, n_ka):
    kc = pl.program_id(2)

    @pl.when(kc == 0)
    def _():
        acc_ref[...] = jnp.zeros(acc_ref.shape, jnp.float32)

    @pl.when(kc < n_ka)                                 # attn part of the contraction
    def _():
        acc_ref[...] += jnp.dot(attn_ref[0], w2a_ref[...],
                                preferred_element_type=jnp.float32)

    @pl.when(kc >= n_ka)                                # gelu(mlp) part of the contraction
    def _():
        acc_ref[...] += jnp.dot(g_ref[0], w2m_ref[...],
                                preferred_element_type=jnp.float32)

    @pl.when(kc == pl.num_programs(2) - 1)
    def _():
        out = acc_ref[...] + b2_ref[...]
        o_ref[0] = (x_ref[0] + gate_ref[0] * out).astype(o_ref.dtype)
        # TODO(synk): torch fp16 nan_to_num clamp branch omitted (f32 residual path).


# ---------------------------------------------------------------------------
# Wrapper
# ---------------------------------------------------------------------------
def single_stream_block(x, pe, shift, scale, gate, params, num_heads, *,
                        mod_row_tile=256, lin1_row_tile=256, qkv_col_tile=512,
                        mlp_col_tile=1024, q_tile=256, kv_tile=256,
                        lin2_row_tile=256, lin2_k_tile=1024):
    B, L, H = x.shape
    assert H % num_heads == 0
    D = H // num_heads
    assert D % 2 == 0
    M = params["w2"].shape[0] - H
    assert params["w1"].shape == (H, 3 * H + M)

    f32, bf16 = jnp.float32, jnp.bfloat16
    vmem_limit = _vmem_limit_bytes()

    # ---- tile choices (auto-clamped to the problem; sweep for production sizes) ----
    tl0 = _pick_tile(L, mod_row_tile, 8)
    trc = _pick_tile(L, lin1_row_tile, 8)      # larger -> fewer W1 re-streams per batch row
    tnq = _pick_tile(H, qkv_col_tile, D)       # W1 qkv column slab (head aligned)
    tnm = _pick_tile(M, mlp_col_tile, 128)     # W1 mlp column slab
    tq = _pick_tile(L, q_tile, 8)
    tk = _pick_tile(L, kv_tile, 8)
    tl2 = _pick_tile(L, lin2_row_tile, 8)
    tkc = _pick_tile(math.gcd(H, M), lin2_k_tile, 128)   # linear2 contraction tile

    # ---- host-side weight prep (once) ----------------------------------------------
    # Fold torch's interleaved (2i, 2i+1) RoPE pairing into a per-head half-split column
    # permutation of W1's q/k columns + q/k norm scales; in-kernel partner = roll(D//2).
    half = np.concatenate([np.arange(0, D, 2), np.arange(1, D, 2)])
    qk_cols = np.concatenate([h * D + half for h in range(num_heads)])
    perm_qkv = np.concatenate([qk_cols, H + qk_cols, 2 * H + np.arange(H)])

    w1_qkv = params["w1"][:, perm_qkv].astype(bf16)            # (H, 3H)
    b1_qkv = params["b1"][perm_qkv][None, :].astype(f32)       # (1, 3H)
    w1_mlp = params["w1"][:, 3 * H:].astype(bf16)              # (H, M)
    b1_mlp = params["b1"][3 * H:][None, :].astype(f32)         # (1, M)
    w2_attn = params["w2"][:H].astype(bf16)                    # (H, H)
    w2_mlp = params["w2"][H:].astype(bf16)                     # (M, H)
    b2 = params["b2"][None, :].astype(f32)                     # (1, H)

    sm_scale = D ** -0.5                                       # folded into q_norm scale
    qns = (params["q_norm"][half] * sm_scale).astype(f32)
    kns = params["k_norm"][half].astype(f32)
    ns = jnp.stack([qns, kns])[:, None, :]                     # (2, 1, D)

    # RoPE coefficients in half-split order: out = cs * t + co * roll(t, D//2)
    pe_l = pe.reshape(L, D // 2, 2, 2).astype(f32)
    cs = jnp.concatenate([pe_l[:, :, 0, 0], pe_l[:, :, 1, 1]], axis=-1)   # (L, D)
    co = jnp.concatenate([pe_l[:, :, 0, 1], pe_l[:, :, 1, 0]], axis=-1)   # (L, D)

    # ---- K0: LayerNorm + modulation -------------------------------------------------
    x_mod = pl.pallas_call(
        _mod_kernel,
        out_shape=jax.ShapeDtypeStruct((B, L, H), bf16),
        grid_spec=pltpu.PrefetchScalarGridSpec(
            num_scalar_prefetch=0,
            grid=(B, L // tl0),
            in_specs=[
                pl.BlockSpec((1, tl0, H), lambda b, l: (b, l, 0)),
                pl.BlockSpec((1, 1, H), lambda b, l: (b, 0, 0)),
                pl.BlockSpec((1, 1, H), lambda b, l: (b, 0, 0)),
            ],
            out_specs=pl.BlockSpec((1, tl0, H), lambda b, l: (b, l, 0))),
        compiler_params=pltpu.CompilerParams(
            dimension_semantics=("parallel", "parallel"),
            vmem_limit_bytes=vmem_limit),
    )(x, shift, scale)

    # ---- K1: linear1 qkv columns + QKNorm + RoPE (W1 streamed in column slabs) ------
    n_q_tiles = H // tnq
    qkv = pl.pallas_call(
        functools.partial(_lin1_qkv_kernel, head_dim=D, v_tile_start=2 * n_q_tiles),
        out_shape=jax.ShapeDtypeStruct((B, L, 3 * H), bf16),
        grid_spec=pltpu.PrefetchScalarGridSpec(
            num_scalar_prefetch=0,
            grid=(B, L // trc, 3 * n_q_tiles),
            in_specs=[
                pl.BlockSpec((1, trc, H), lambda b, r, n: (b, r, 0)),   # x_mod resident over n
                pl.BlockSpec((H, tnq), lambda b, r, n: (0, n)),         # W1 qkv column slab
                pl.BlockSpec((1, tnq), lambda b, r, n: (0, n)),         # b1 qkv
                pl.BlockSpec((1, 1, D),                                  # q_norm*sm or k_norm
                             lambda b, r, n: (jnp.where(n < n_q_tiles, 0, 1), 0, 0)),
                pl.BlockSpec((trc, D), lambda b, r, n: (r, 0)),          # rope cs
                pl.BlockSpec((trc, D), lambda b, r, n: (r, 0)),          # rope co
            ],
            out_specs=pl.BlockSpec((1, trc, tnq), lambda b, r, n: (b, r, n))),
        compiler_params=pltpu.CompilerParams(
            dimension_semantics=("parallel", "parallel", "arbitrary"),
            vmem_limit_bytes=vmem_limit),
    )(x_mod, w1_qkv, b1_qkv, ns, cs, co)

    # ---- K2: linear1 mlp columns + tanh-GELU (W1 streamed) --------------------------
    g = pl.pallas_call(
        _lin1_mlp_kernel,
        out_shape=jax.ShapeDtypeStruct((B, L, M), bf16),
        grid_spec=pltpu.PrefetchScalarGridSpec(
            num_scalar_prefetch=0,
            grid=(B, L // trc, M // tnm),
            in_specs=[
                pl.BlockSpec((1, trc, H), lambda b, r, n: (b, r, 0)),
                pl.BlockSpec((H, tnm), lambda b, r, n: (0, n)),
                pl.BlockSpec((1, tnm), lambda b, r, n: (0, n)),
            ],
            out_specs=pl.BlockSpec((1, trc, tnm), lambda b, r, n: (b, r, n))),
        compiler_params=pltpu.CompilerParams(
            dimension_semantics=("parallel", "parallel", "arbitrary"),
            vmem_limit_bytes=vmem_limit),
    )(x_mod, w1_mlp, b1_mlp)

    # ---- K3: flash attention (q/k/v sliced from the combined qkv slab) --------------
    attn = pl.pallas_call(
        functools.partial(_attn_kernel, num_heads=num_heads, head_dim=D),
        out_shape=jax.ShapeDtypeStruct((B, L, H), bf16),
        grid_spec=pltpu.PrefetchScalarGridSpec(
            num_scalar_prefetch=0,
            grid=(B, L // tq, L // tk),
            in_specs=[
                pl.BlockSpec((1, tq, H), lambda b, i, j: (b, i, 0)),    # q slab
                pl.BlockSpec((1, tk, H), lambda b, i, j: (b, j, 1)),    # k slab
                pl.BlockSpec((1, tk, H), lambda b, i, j: (b, j, 2)),    # v slab
            ],
            out_specs=pl.BlockSpec((1, tq, H), lambda b, i, j: (b, i, 0)),
            scratch_shapes=[
                pltpu.VMEM((tq, H), jnp.float32),                  # online-softmax acc slab
                pltpu.VMEM((num_heads, tq, 1), jnp.float32),       # running max per head
                pltpu.VMEM((num_heads, tq, 1), jnp.float32),       # running denom per head
            ]),
        compiler_params=pltpu.CompilerParams(
            dimension_semantics=("parallel", "parallel", "arbitrary"),
            vmem_limit_bytes=vmem_limit),
    )(qkv, qkv, qkv)
    # TODO(synk): attn_mask is not supported (mask=None path only).

    # ---- K4: split linear2 (contraction tiled: first H of attn, then M of mlp) ------
    n_ka = H // tkc
    n_km = M // tkc
    out = pl.pallas_call(
        functools.partial(_lin2_kernel, n_ka=n_ka),
        out_shape=jax.ShapeDtypeStruct((B, L, H), x.dtype),
        grid_spec=pltpu.PrefetchScalarGridSpec(
            num_scalar_prefetch=0,
            grid=(B, L // tl2, n_ka + n_km),
            in_specs=[
                pl.BlockSpec((1, tl2, H), lambda b, l, k: (b, l, 0)),    # residual x
                pl.BlockSpec((1, 1, H), lambda b, l, k: (b, 0, 0)),      # gate
                pl.BlockSpec((1, tl2, tkc),
                             lambda b, l, k: (b, l, jnp.minimum(k, n_ka - 1))),   # attn tile
                pl.BlockSpec((1, tl2, tkc),
                             lambda b, l, k: (b, l, jnp.maximum(k - n_ka, 0))),   # gelu tile
                pl.BlockSpec((tkc, H),
                             lambda b, l, k: (jnp.minimum(k, n_ka - 1), 0)),      # W2 attn rows
                pl.BlockSpec((tkc, H),
                             lambda b, l, k: (jnp.maximum(k - n_ka, 0), 0)),      # W2 mlp rows
                pl.BlockSpec((1, H), lambda b, l, k: (0, 0)),            # b2
            ],
            out_specs=pl.BlockSpec((1, tl2, H), lambda b, l, k: (b, l, 0)),
            scratch_shapes=[pltpu.VMEM((tl2, H), jnp.float32)]),
        compiler_params=pltpu.CompilerParams(
            dimension_semantics=("parallel", "parallel", "arbitrary"),
            vmem_limit_bytes=vmem_limit),
    )(x, gate, attn, g, w2_attn, w2_mlp, b2)
    return out


# ---------------------------------------------------------------------------
# Pure-JAX reference (mirrors the PyTorch forward, fp32)
# ---------------------------------------------------------------------------
def reference_forward(x, pe, shift, scale, gate, params, num_heads):
    B, L, H = x.shape
    D = H // num_heads
    mean = x.mean(-1, keepdims=True)
    var = ((x - mean) ** 2).mean(-1, keepdims=True)
    xn = (x - mean) / jnp.sqrt(var + 1e-6)
    x_mod = shift + (1.0 + scale) * xn
    lin1 = x_mod @ params["w1"] + params["b1"]
    qkv, mlp = lin1[..., :3 * H], lin1[..., 3 * H:]
    qkv = qkv.reshape(B, L, 3, num_heads, D).transpose(2, 0, 3, 1, 4)
    q, k, v = qkv[0], qkv[1], qkv[2]

    def rms(t, w):
        return t * jax.lax.rsqrt(jnp.mean(t * t, -1, keepdims=True) + 1e-6) * w

    q = rms(q, params["q_norm"])
    k = rms(k, params["k_norm"])

    fc = pe.reshape(1, 1, L, D // 2, 2, 2)

    def rope(t):
        t_ = t.reshape(B, num_heads, L, D // 2, 1, 2)
        out = fc[..., 0] * t_[..., 0] + fc[..., 1] * t_[..., 1]
        return out.reshape(B, num_heads, L, D)

    q, k = rope(q), rope(k)
    s = jnp.einsum("bhld,bhmd->bhlm", q, k) * (D ** -0.5)
    p = jax.nn.softmax(s, axis=-1)
    attn = jnp.einsum("bhlm,bhmd->bhld", p, v)
    attn = attn.transpose(0, 2, 1, 3).reshape(B, L, H)
    c = math.sqrt(2.0 / math.pi)
    g = 0.5 * mlp * (1.0 + jnp.tanh(c * (mlp + 0.044715 * mlp ** 3)))
    out = jnp.concatenate([attn, g], -1) @ params["w2"] + params["b2"]
    return x + gate * out


if __name__ == "__main__":
    B, L, hidden_size, num_heads = 2, 32, 256, 2
    head_dim = hidden_size // num_heads          # 128 -> lane-aligned head slices
    mlp_hidden = int(hidden_size * 4.0)

    key = jax.random.PRNGKey(0)
    ks = jax.random.split(key, 12)

    x = jax.random.normal(ks[0], (B, L, hidden_size), jnp.float32)
    pe = jax.random.normal(ks[1], (1, 1, L, head_dim // 2, 2, 2), jnp.float32)
    shift = 0.1 * jax.random.normal(ks[2], (B, 1, hidden_size), jnp.float32)
    scale = 0.1 * jax.random.normal(ks[3], (B, 1, hidden_size), jnp.float32)
    gate = 0.1 * jax.random.normal(ks[4], (B, 1, hidden_size), jnp.float32)

    params = {
        # linear1: hidden -> 3*hidden + mlp_hidden  (stored as (in, out))
        "w1": 0.05 * jax.random.normal(ks[5], (hidden_size, 3 * hidden_size + mlp_hidden), jnp.float32),
        "b1": 0.05 * jax.random.normal(ks[6], (3 * hidden_size + mlp_hidden,), jnp.float32),
        # linear2: hidden + mlp_hidden -> hidden
        "w2": 0.05 * jax.random.normal(ks[7], (hidden_size + mlp_hidden, hidden_size), jnp.float32),
        "b2": 0.05 * jax.random.normal(ks[8], (hidden_size,), jnp.float32),
        # QKNorm RMSNorm scales
        "q_norm": 1.0 + 0.1 * jax.random.normal(ks[9], (head_dim,), jnp.float32),
        "k_norm": 1.0 + 0.1 * jax.random.normal(ks[10], (head_dim,), jnp.float32),
    }

    y = single_stream_block(x, pe, shift, scale, gate, params, num_heads)
    y = jax.block_until_ready(y)

    y_ref = reference_forward(x, pe, shift, scale, gate, params, num_heads)
    np.testing.assert_allclose(np.asarray(y), np.asarray(y_ref), rtol=5e-2, atol=5e-2)

    print("KERNEL_OK")
</pallas_src>

<mosaic_0001>
module attributes {stable_mosaic.version = 11 : i64} {
  func.func @_mod_kernel(%arg0: i32, %arg1: i32, %arg2: memref<1x32x256xf32, #tpu.memory_space<vmem>>, %arg3: memref<1x1x256xf32, #tpu.memory_space<vmem>>, %arg4: memref<1x1x256xf32, #tpu.memory_space<vmem>>, %arg5: memref<1x32x256xbf16, #tpu.memory_space<vmem>>) attributes {dimension_semantics = [#tpu.dimension_semantics<parallel>, #tpu.dimension_semantics<parallel>], iteration_bounds = array<i64: 2, 1>, scalar_prefetch = 0 : i64, scratch_operands = 0 : i64, tpu.core_type = #tpu.core_type<tc>, window_params = [{transform_indices = @transform_0, window_bounds = array<i64: 1, 32, 256>}, {transform_indices = @transform_1, window_bounds = array<i64: 1, 1, 256>}, {transform_indices = @transform_2, window_bounds = array<i64: 1, 1, 256>}, {transform_indices = @transform_3, window_bounds = array<i64: 1, 32, 256>}]} {
    %c0 = arith.constant 0 : index
    %c0_0 = arith.constant 0 : index
    %c0_1 = arith.constant 0 : index
    %0 = vector.load %arg2[%c0, %c0_0, %c0_1] : memref<1x32x256xf32, #tpu.memory_space<vmem>>, vector<1x32x256xf32>
    %1 = vector.shape_cast %0 : vector<1x32x256xf32> to vector<32x256xf32>
    %cst = arith.constant dense<0.000000e+00> : vector<32xf32>
    %2 = vector.multi_reduction <add>, %1, %cst [1] : vector<32x256xf32> to vector<32xf32>
    %3 = vector.shape_cast %2 : vector<32xf32> to vector<32x1xf32>
    %cst_2 = arith.constant 2.560000e+02 : f32
    %4 = vector.broadcast %cst_2 : f32 to vector<32x1xf32>
    %5 = arith.divf %3, %4 : vector<32x1xf32>
    %6 = vector.broadcast %5 : vector<32x1xf32> to vector<32x256xf32>
    %7 = arith.subf %1, %6 : vector<32x256xf32>
    %8 = arith.mulf %7, %7 : vector<32x256xf32>
    %cst_3 = arith.constant dense<0.000000e+00> : vector<32xf32>
    %9 = vector.multi_reduction <add>, %8, %cst_3 [1] : vector<32x256xf32> to vector<32xf32>
    %10 = vector.shape_cast %9 : vector<32xf32> to vector<32x1xf32>
    %cst_4 = arith.constant 2.560000e+02 : f32
    %11 = vector.broadcast %cst_4 : f32 to vector<32x1xf32>
    %12 = arith.divf %10, %11 : vector<32x1xf32>
    %cst_5 = arith.constant 9.99999997E-7 : f32
    %13 = vector.broadcast %cst_5 : f32 to vector<32x1xf32>
    %14 = arith.addf %12, %13 : vector<32x1xf32>
    %15 = math.rsqrt %14 : vector<32x1xf32>
    %16 = vector.broadcast %15 : vector<32x1xf32> to vector<32x256xf32>
    %17 = arith.mulf %7, %16 : vector<32x256xf32>
    %c0_6 = arith.constant 0 : index
    %c0_7 = arith.constant 0 : index
    %c0_8 = arith.constant 0 : index
    %18 = vector.load %arg3[%c0_6, %c0_7, %c0_8] : memref<1x1x256xf32, #tpu.memory_space<vmem>>, vector<1x1x256xf32>
    %19 = vector.shape_cast %18 : vector<1x1x256xf32> to vector<1x256xf32>
    %c0_9 = arith.constant 0 : index
    %c0_10 = arith.constant 0 : index
    %c0_11 = arith.constant 0 : index
    %20 = vector.load %arg4[%c0_9, %c0_10, %c0_11] : memref<1x1x256xf32, #tpu.memory_space<vmem>>, vector<1x1x256xf32>
    %21 = vector.shape_cast %20 : vector<1x1x256xf32> to vector<1x256xf32>
    %cst_12 = arith.constant 1.000000e+00 : f32
    %22 = vector.broadcast %cst_12 : f32 to vector<1x256xf32>
    %23 = arith.addf %22, %21 : vector<1x256xf32>
    %24 = vector.broadcast %23 : vector<1x256xf32> to vector<32x256xf32>
    %25 = arith.mulf %24, %17 : vector<32x256xf32>
    %26 = vector.broadcast %19 : vector<1x256xf32> to vector<32x256xf32>
    %27 = arith.addf %26, %25 : vector<32x256xf32>
    %28 = arith.truncf %27 : vector<32x256xf32> to vector<32x256xbf16>
    %c0_13 = arith.constant 0 : index
    %c0_14 = arith.constant 0 : index
    %c0_15 = arith.constant 0 : index
    %29 = vector.load %arg5[%c0_13, %c0_14, %c0_15] : memref<1x32x256xbf16, #tpu.memory_space<vmem>>, vector<1x32x256xbf16>
    %30 = vector.shape_cast %29 : vector<1x32x256xbf16> to vector<32x256xbf16>
    %31 = vector.shape_cast %28 : vector<32x256xbf16> to vector<1x32x256xbf16>
    tpu.vector_store %arg5[%c0_13, %c0_14, %c0_15], %31 {strides = array<i32>} : memref<1x32x256xbf16, #tpu.memory_space<vmem>>, vector<1x32x256xbf16>,
    return
  }
  func.func @transform_0(%arg0: i32, %arg1: i32) -> (i32, i32, i32) {
    %c0_i32 = arith.constant 0 : i32
    %c0_i32_0 = arith.constant 0 : i32
    return %arg0, %arg1, %c0_i32 : i32, i32, i32
  }
  func.func @transform_1(%arg0: i32, %arg1: i32) -> (i32, i32, i32) {
    %c0_i32 = arith.constant 0 : i32
    %c0_i32_0 = arith.constant 0 : i32
    %c0_i32_1 = arith.constant 0 : i32
    return %arg0, %c0_i32, %c0_i32_0 : i32, i32, i32
  }
  func.func @transform_2(%arg0: i32, %arg1: i32) -> (i32, i32, i32) {
    %c0_i32 = arith.constant 0 : i32
    %c0_i32_0 = arith.constant 0 : i32
    %c0_i32_1 = arith.constant 0 : i32
    return %arg0, %c0_i32, %c0_i32_0 : i32, i32, i32
  }
  func.func @transform_3(%arg0: i32, %arg1: i32) -> (i32, i32, i32) {
    %c0_i32 = arith.constant 0 : i32
    %c0_i32_0 = arith.constant 0 : i32
    return %arg0, %arg1, %c0_i32 : i32, i32, i32
  }
}

</mosaic_0001>

<llo_original>
// kernel: tpu_custom_call.1
$region0: #{tpu_custom_call.1}
  #allocation0 [shape = 'u32[]', space=smem, size = 0x4, offset = 0x4, fixed_abs, tag = 'smem constant byte address 0x4 - core index']
  #allocation1 [shape = 'u32[144,128]{1,0:T(1,128)}', space=vmem, size = 0x12000, scoped, tag = 'internal scratch']
  %s0 = inlined_call_operand.hbm [shape: f32[2,32,256], index: 0, kind: input, shape index: {}]
  %s1 = inlined_call_operand.hbm [shape: f32[2,1,256], index: 1, kind: input, shape index: {}]
  %s2 = inlined_call_operand.vmem [shape: f32[2,1,256], index: 2, kind: input, shape index: {}]
  %s3 = inlined_call_operand.hbm [shape: bf16[2,32,256], index: 3, kind: output, shape index: {}]
  %s4 = sld [smem:[#allocation0]]
  $region53: #{tpu_custom_call.1} parent=0
    _
  %s6 = ssub.s32 1, %s4
  %s7 = scalar_select 0, %s6, %s4
  $region1: #{tpu_custom_call.1} parent=0
    #allocation2 [shape = 'u8[65536]{0}', space=vmem, size = 0x10000, scoped, tag = 'input window, operand 0']
    #allocation3 [shape = 's32[2]{0}', space=sflag, size = 0x8, scoped, tag = 'scoped memory for tpu_custom_call.1']
    #allocation4 [shape = 's32[2]{0}', space=sflag, size = 0x8, scoped, tag = 'scoped memory for tpu_custom_call.1']
    #allocation5 [shape = 'u8[2048]{0}', space=vmem, size = 0x800, scoped, tag = 'input window, operand 1']
    #allocation6 [shape = 's32[2]{0}', space=sflag, size = 0x8, scoped, tag = 'scoped memory for tpu_custom_call.1']
    #allocation7 [shape = 'u8[32768]{0}', space=vmem, size = 0x8000, scoped, tag = 'output window, operand 0']
    %8 = vsyncpa [#allocation3], 0
    %s9 = scalar_lea.sflag [#allocation3], 1
    %10 = vsyncpa %s9, 0
    %11 = vsyncpa [#allocation6], 0
    %s12 = scalar_lea.sflag [#allocation6], 1
    %13 = vsyncpa %s12, 0
    %14 = vsyncpa [#allocation4], 0
    %s15 = scalar_lea.sflag [#allocation4], 1
    %16 = vsyncpa %s15, 0
    loop: start=0, step=1, limit=4
    $region2: #{tpu_custom_call.1} parent=1 // loop_pre_header
      _
    $region3: #{tpu_custom_call.1} parent=1 // loop_header
      %s18 = sphi 0, %s22
      %p19 = scmp.ge.s32.totalorder %s18, 4
      %s25 = sphi 0, %s37
      %s26 = sphi 0, %s33
      %s27 = sphi 0, %s25
      %s28 = sphi 0, %s26
      %s29 = sphi 0, %s27
      %s30 = sphi 0, %s28
      %s42 = sphi 0, %s44
      %s45 = sphi 0, %s42
      %s46 = sphi 0, %s45
      %s62 = sphi 0, %s46
      %s68 = sphi 0, %s70
      %s71 = sphi 0, %s68
      %s72 = sphi 0, %s71
      %s88 = sphi 0, %s72
      %s94 = sphi 0, %s96
      %s97 = sphi 0, %s94
      %s98 = sphi 0, %s97
      %s114 = sphi 0, %s98
      %s122 = sphi 0, %s124
      %s125 = sphi 0, %s122
      %s126 = sphi 0, %s125
      %s142 = sphi 0, %s126
    $region4: #{tpu_custom_call.1} parent=1 // loop_header_branch
      %21 = sbr.rel (%p19) target = $region8
    $region5: #{tpu_custom_call.1} parent=1 // loop_body
      %s23 = ssub.s32 %s18, 1
      %s24 = ssub.s32 %s18, 2
      %s31 = sadd.s32 1, %s26
      %p32 = scmp.ge.s32.totalorder %s31, 1
      %s33 = scalar_select %p32, 0, %s31
      %s34 = sadd.s32 1, %s25
      %s35 = scalar_select %p32, %s34, %s25
      %p36 = scmp.ge.s32.totalorder %s35, 2
      %s37 = scalar_select %p36, 0, %s35
      %s38 = ssub.s32 %s25, %s37
      %s39 = ssub.s32 %s26, %s33
      %s40 = sor.u32 %s38, %s39
      %p41 = scmp.eq.s32.totalorder %s40, 0
      %s43 = sadd.s32 %s42, 1
      %s44 = scalar_select %p41, %s42, %s43
      %p47 = pneg %p41
      %p48 = scmp.eq.s32.totalorder %s18, 1
      %p49 = por %p47, %p48
      %p50 = scmp.ne.s32.totalorder %s42, %s45
      %p51 = scmp.eq.s32.totalorder %s18, 0
      %p52 = por %p50, %p51
      %p53 = scmp.ne.s32.totalorder %s42, %s45
      %p54 = scmp.eq.s32.totalorder %s23, 1
      %p55 = por %p53, %p54
      %p56 = scmp.ne.s32.totalorder %s45, %s46
      %p57 = scmp.eq.s32.totalorder %s23, 0
      %p58 = por %p56, %p57
      %p59 = scmp.ne.s32.totalorder %s45, %s46
      %p60 = scmp.eq.s32.totalorder %s24, 1
      %p61 = por %p59, %p60
      %p63 = scmp.ne.s32.totalorder %s46, %s62
      %p64 = scmp.eq.s32.totalorder %s24, 0
      %p65 = por %p63, %p64
      %s66 = ssub.s32 %s25, %s37
      %p67 = scmp.eq.s32.totalorder %s66, 0
      %s69 = sadd.s32 %s68, 1
      %s70 = scalar_select %p67, %s68, %s69
      %p73 = pneg %p67
      %p74 = scmp.eq.s32.totalorder %s18, 1
      %p75 = por %p73, %p74
      %p76 = scmp.ne.s32.totalorder %s68, %s71
      %p77 = scmp.eq.s32.totalorder %s18, 0
      %p78 = por %p76, %p77
      %p79 = scmp.ne.s32.totalorder %s68, %s71
      %p80 = scmp.eq.s32.totalorder %s23, 1
      %p81 = por %p79, %p80
      %p82 = scmp.ne.s32.totalorder %s71, %s72
      %p83 = scmp.eq.s32.totalorder %s23, 0
      %p84 = por %p82, %p83
      %p85 = scmp.ne.s32.totalorder %s71, %s72
      %p86 = scmp.eq.s32.totalorder %s24, 1
      %p87 = por %p85, %p86
      %p89 = scmp.ne.s32.totalorder %s72, %s88
      %p90 = scmp.eq.s32.totalorder %s24, 0
      %p91 = por %p89, %p90
      %s92 = ssub.s32 %s25, %s37
      %p93 = scmp.eq.s32.totalorder %s92, 0
      %s95 = sadd.s32 %s94, 1
      %s96 = scalar_select %p93, %s94, %s95
      %p99 = pneg %p93
      %p100 = scmp.eq.s32.totalorder %s18, 1
      %p101 = por %p99, %p100
      %p102 = scmp.ne.s32.totalorder %s94, %s97
      %p103 = scmp.eq.s32.totalorder %s18, 0
      %p104 = por %p102, %p103
      %p105 = scmp.ne.s32.totalorder %s94, %s97
      %p106 = scmp.eq.s32.totalorder %s23, 1
      %p107 = por %p105, %p106
      %p108 = scmp.ne.s32.totalorder %s97, %s98
      %p109 = scmp.eq.s32.totalorder %s23, 0
      %p110 = por %p108, %p109
      %p111 = scmp.ne.s32.totalorder %s97, %s98
      %p112 = scmp.eq.s32.totalorder %s24, 1
      %p113 = por %p111, %p112
      %p115 = scmp.ne.s32.totalorder %s98, %s114
      %p116 = scmp.eq.s32.totalorder %s24, 0
      %p117 = por %p115, %p116
      %s118 = ssub.s32 %s25, %s37
      %s119 = ssub.s32 %s26, %s33
      %s120 = sor.u32 %s118, %s119
      %p121 = scmp.eq.s32.totalorder %s120, 0
      %s123 = sadd.s32 %s122, 1
      %s124 = scalar_select %p121, %s122, %s123
      %p127 = pneg %p121
      %p128 = scmp.eq.s32.totalorder %s18, 1
      %p129 = por %p127, %p128
      %p130 = scmp.ne.s32.totalorder %s122, %s125
      %p131 = scmp.eq.s32.totalorder %s18, 0
      %p132 = por %p130, %p131
      %p133 = scmp.ne.s32.totalorder %s122, %s125
      %p134 = scmp.eq.s32.totalorder %s23, 1
      %p135 = por %p133, %p134
      %p136 = scmp.ne.s32.totalorder %s125, %s126
      %p137 = scmp.eq.s32.totalorder %s23, 0
      %p138 = por %p136, %p137
      %p139 = scmp.ne.s32.totalorder %s125, %s126
      %p140 = scmp.eq.s32.totalorder %s24, 1
      %p141 = por %p139, %p140
      %p143 = scmp.ne.s32.totalorder %s126, %s142
      %p144 = scmp.eq.s32.totalorder %s24, 0
      %p145 = por %p143, %p144
      %p146 = scmp.le.s32.totalorder 1, %s18
      %p147 = scmp.lt.s32.totalorder %s18, 3
      %p148 = pnand %p146, %p147
      %p149 = pneg %p148
      // Predicated region
      $region9: #{tpu_custom_call.1} parent=5 // pred_check
        _
      $region10: #{tpu_custom_call.1} parent=5 // pred_check_branch
        %151 = sbr.rel (%p148) target = $region12
      $region11: #{tpu_custom_call.1} parent=5 // pred_region
        %s152 = ssub.s32 %s18, 1
      $region12: #{tpu_custom_call.1} parent=5 // pred_fallthru
        _
      %p153 = scmp.lt.s32.totalorder %s18, 2
      // Predicated region
      $region13: #{tpu_custom_call.1} parent=5 // pred_check
        %p154 = pneg %p153
      $region14: #{tpu_custom_call.1} parent=5 // pred_check_branch
        %156 = sbr.rel (%p154) target = $region16
      $region15: #{tpu_custom_call.1} parent=5 // pred_region
        // Predicated region
        $region17: #{tpu_custom_call.1} parent=15 // pred_check
          %p157 = pneg %p52
        $region18: #{tpu_custom_call.1} parent=15 // pred_check_branch
          %159 = sbr.rel (%p157) target = $region20
        $region19: #{tpu_custom_call.1} parent=15 // pred_region
          %s160 = sand.u32 %s42, 1
          %s161 = scalar_lea.sflag [#allocation3], %s160
          %s162 = sand.u32 %s42, 1
          %s163 = smul.addr %s162, 64
          %s164 = scalar_lea.vmem [#allocation2], %s163
          %s165 = smul.u32 4, %s26
          %s167 = ssub.s32 1024, 1024
          %168 = vsyncadd %s161, %s167
          %s169 = smul.addr %s165, 2
          %s170 = smul.addr %s25, 8
          %s171 = sadd.s32 %s169, %s170
          %s172 = smul.addr %s171, 128
          %s173 = scalar_lea.hbm %s0, %s172
          %s174 = sshll.u32 %s164, 4
          %s175 = int_to_ptr.vmem [resolvable:$true] %s174
          %180 = dma.hbm_to_vmem [thread:$0]  %s173, 1024, %s175, %s161, 256, 256, 16
        $region20: #{tpu_custom_call.1} parent=15 // pred_fallthru
          _
        // Predicated region
        $region21: #{tpu_custom_call.1} parent=15 // pred_check
          %p181 = pneg %p78
        $region22: #{tpu_custom_call.1} parent=15 // pred_check_branch
          %183 = sbr.rel (%p181) target = $region24
        $region23: #{tpu_custom_call.1} parent=15 // pred_region
          %s184 = sand.u32 %s68, 1
          %s185 = scalar_lea.sflag [#allocation6], %s184
          %s186 = sand.u32 %s68, 1
          %s187 = smul.addr %s186, 2
          %s188 = scalar_lea.vmem [#allocation5], %s187
          %s190 = ssub.s32 32, 32
          %191 = vsyncadd %s185, %s190
          %s192 = smul.addr %s25, 2
          %s193 = smul.addr %s192, 16
          %s194 = scalar_lea.hbm %s1, %s193
          %s196 = sshll.u32 %s188, 4
          %s197 = int_to_ptr.vmem [resolvable:$true] %s196
          %199 = dma.hbm_to_vmem [thread:$0]  %s194, 32, %s197, %s185
        $region24: #{tpu_custom_call.1} parent=15 // pred_fallthru
          _
        // Predicated region
        $region25: #{tpu_custom_call.1} parent=15 // pred_check
          %p200 = pneg %p104
        $region26: #{tpu_custom_call.1} parent=15 // pred_check_branch
          %202 = sbr.rel (%p200) target = $region28
        $region27: #{tpu_custom_call.1} parent=15 // pred_region
          %p203 = scmp.lt.s32.totalorder %s25, 1
          %s204 = scalar_select %p203, %s25, 1
          %s205 = smul.addr %s204, 2
          %s206 = scalar_lea.vmem %s2, %s205
        $region28: #{tpu_custom_call.1} parent=15 // pred_fallthru
          _
      $region16: #{tpu_custom_call.1} parent=5 // pred_fallthru
        _
      %p207 = scmp.le.s32.totalorder 1, %s18
      %p208 = scmp.lt.s32.totalorder %s18, 3
      %p209 = pnand %p207, %p208
      %p210 = pneg %p209
      // Predicated region
      $region29: #{tpu_custom_call.1} parent=5 // pred_check
        _
      $region30: #{tpu_custom_call.1} parent=5 // pred_check_branch
        %212 = sbr.rel (%p209) target = $region32
      $region31: #{tpu_custom_call.1} parent=5 // pred_region
        %s213 = ssub.s32 %s18, 1
        %s214 = sand.u32 %s45, 1
        %s215 = scalar_lea.sflag [#allocation3], %s214
        %s216 = sand.u32 %s45, 1
        %s217 = smul.addr %s216, 64
        %s218 = scalar_lea.vmem [#allocation2], %s217
        // Predicated region
        $region33: #{tpu_custom_call.1} parent=31 // pred_check
          %p219 = pneg %p58
        $region34: #{tpu_custom_call.1} parent=31 // pred_check_branch
          %221 = sbr.rel (%p219) target = $region36
        $region35: #{tpu_custom_call.1} parent=31 // pred_region
          %222 = dma.done %s215, 1024
        $region36: #{tpu_custom_call.1} parent=31 // pred_fallthru
          _
        %s223 = sand.u32 %s71, 1
        %s224 = scalar_lea.sflag [#allocation6], %s223
        %s225 = sand.u32 %s71, 1
        %s226 = smul.addr %s225, 2
        %s227 = scalar_lea.vmem [#allocation5], %s226
        // Predicated region
        $region37: #{tpu_custom_call.1} parent=31 // pred_check
          %p228 = pneg %p84
        $region38: #{tpu_custom_call.1} parent=31 // pred_check_branch
          %230 = sbr.rel (%p228) target = $region40
        $region39: #{tpu_custom_call.1} parent=31 // pred_region
          %231 = dma.done %s224, 32
        $region40: #{tpu_custom_call.1} parent=31 // pred_fallthru
          _
        %s232 = sand.u32 %s45, 1
        %s233 = scalar_lea.sflag [#allocation3], %s232
        %s234 = sand.u32 %s45, 1
        %s235 = smul.addr %s234, 64
        %s236 = scalar_lea.vmem [#allocation2], %s235
        %p237 = pneg %p58
        %p238 = pneg %p55
        %s239 = sand.u32 %s71, 1
        %s240 = scalar_lea.sflag [#allocation6], %s239
        %s241 = sand.u32 %s71, 1
        %s242 = smul.addr %s241, 2
        %s243 = scalar_lea.vmem [#allocation5], %s242
        %p244 = pneg %p84
        %p245 = pneg %p81
        %p246 = scmp.lt.s32.totalorder %s27, 1
        %s247 = scalar_select %p246, %s27, 1
        %s248 = smul.addr %s247, 2
        %s249 = scalar_lea.vmem %s2, %s248
        %p250 = pneg %p110
        %p251 = pneg %p107
        %p252 = pneg %p138
        %p253 = pneg %p135
        %s254 = sand.u32 %s125, 1
        %s255 = scalar_lea.sflag [#allocation4], %s254
        %s256 = sand.u32 %s125, 1
        %s257 = smul.addr %s256, 32
        %s258 = scalar_lea.vmem [#allocation7], %s257
        %s259 = smul.u32 4, %s28
        %p260 = scmp.lt.s32.totalorder %s27, 1
        %s261 = scalar_select %p260, %s27, 1
        %s262 = smul.addr %s261, 2
        %s263 = scalar_lea.vmem %s2, %s262
        %s264 = smul.u32 4, %s28
        %v265 = vld [vmem:[%s218] sm:$0xff]
        %v266 = vld [vmem:[%s218 + $0x8] sm:$0xff]
        %v267 = vld [vmem:[%s218 + $0x10] sm:$0xff]
        %v268 = vld [vmem:[%s218 + $0x18] sm:$0xff]
        %v269 = vld [vmem:[%s218 + $0x20] sm:$0xff]
        %v270 = vld [vmem:[%s218 + $0x28] sm:$0xff]
        %v271 = vld [vmem:[%s218 + $0x30] sm:$0xff]
        %v272 = vld [vmem:[%s218 + $0x38] sm:$0xff]
        %v273 = vadd.f32 %v265, %v266
        %274 = vadd.xlane.f32.xlu0 %v273
        %v275 = vpop.xlane.xlu0 %274
        %v276 = vadd.f32 %v267, %v268
        %277 = vadd.xlane.f32.xlu0 %v276
        %v278 = vpop.xlane.xlu0 %277
        %v279 = vadd.f32 %v269, %v270
        %280 = vadd.xlane.f32.xlu0 %v279
        %v281 = vpop.xlane.xlu0 %280
        %v282 = vadd.f32 %v271, %v272
        %283 = vadd.xlane.f32.xlu0 %v282
        %v284 = vpop.xlane.xlu0 %283
        %v285 = vrcp.pop 256.0
        %v286 = vmul.f32 %v275, %v285
        %v287 = vmul.f32 %v278, %v285
        %v288 = vmul.f32 %v281, %v285
        %v289 = vmul.f32 %v284, %v285
        %v290 = vsub.f32 %v265, %v286
        %v291 = vsub.f32 %v266, %v286
        %v292 = vsub.f32 %v267, %v287
        %v293 = vsub.f32 %v268, %v287
        %v294 = vsub.f32 %v269, %v288
        %v295 = vsub.f32 %v270, %v288
        %v296 = vsub.f32 %v271, %v289
        %v297 = vsub.f32 %v272, %v289
        %v298 = vmul.f32 %v290, %v290
        %v299 = vmul.f32 %v291, %v291
        %v300 = vmul.f32 %v292, %v292
        %v301 = vmul.f32 %v293, %v293
        %v302 = vmul.f32 %v294, %v294
        %v303 = vmul.f32 %v295, %v295
        %v304 = vmul.f32 %v296, %v296
        %v305 = vmul.f32 %v297, %v297
        %v306 = vadd.f32 %v298, %v299
        %307 = vadd.xlane.f32.xlu0 %v306
        %v308 = vpop.xlane.xlu0 %307
        %v309 = vadd.f32 %v300, %v301
        %310 = vadd.xlane.f32.xlu0 %v309
        %v311 = vpop.xlane.xlu0 %310
        %v312 = vadd.f32 %v302, %v303
        %313 = vadd.xlane.f32.xlu0 %v312
        %v314 = vpop.xlane.xlu0 %313
        %v315 = vadd.f32 %v304, %v305
        %316 = vadd.xlane.f32.xlu0 %v315
        %v317 = vpop.xlane.xlu0 %316
        %v318 = vmul.f32 %v308, %v285
        %v319 = vmul.f32 %v311, %v285
        %v320 = vmul.f32 %v314, %v285
        %v321 = vmul.f32 %v317, %v285
        %v322 = vadd.f32 %v318, 1e-06
        %v323 = vadd.f32 %v319, 1e-06
        %v324 = vadd.f32 %v320, 1e-06
        %v325 = vadd.f32 %v321, 1e-06
        %v326 = vrsqrt.pop %v322
        %v327 = vrsqrt.pop %v323
        %v328 = vrsqrt.pop %v324
        %v329 = vrsqrt.pop %v325
        %v330 = vmul.f32 %v290, %v326
        %v331 = vmul.f32 %v291, %v326
        %v332 = vmul.f32 %v292, %v327
        %v333 = vmul.f32 %v293, %v327
        %v334 = vmul.f32 %v294, %v328
        %v335 = vmul.f32 %v295, %v328
        %v336 = vmul.f32 %v296, %v329
        %v337 = vmul.f32 %v297, %v329
        %v338 = vld [vmem:[%s227] sm:$0x3]
        %v339 = vld [vmem:[%s263] sm:$0x3]
        %v340 = vadd.f32 %v339, 1.0
        %v342 = vlaneseq
        %v343 = vshrl.u32 %v342, 7
        %v344 = vsub.s32 0, %v343
        %v345 = vrot.slane %v340, %v344
        %v346 = vlaneseq
        %v347 = vshrl.u32 %v346, 7
        %v348 = vsub.s32 1, %v347
        %v349 = vrot.slane %v340, %v348
        %v352 = vmul.f32 %v345, %v330
        %v353 = vmul.f32 %v349, %v331
        %v354 = vmul.f32 %v345, %v332
        %v355 = vmul.f32 %v349, %v333
        %v356 = vmul.f32 %v345, %v334
        %v357 = vmul.f32 %v349, %v335
        %v358 = vmul.f32 %v345, %v336
        %v359 = vmul.f32 %v349, %v337
        %v361 = vlaneseq
        %v362 = vshrl.u32 %v361, 7
        %v363 = vsub.s32 0, %v362
        %v364 = vrot.slane %v338, %v363
        %v365 = vlaneseq
        %v366 = vshrl.u32 %v365, 7
        %v367 = vsub.s32 1, %v366
        %v368 = vrot.slane %v338, %v367
        %v371 = vadd.f32 %v364, %v352
        %v372 = vadd.f32 %v368, %v353
        %v373 = vadd.f32 %v364, %v354
        %v374 = vadd.f32 %v368, %v355
        %v375 = vadd.f32 %v364, %v356
        %v376 = vadd.f32 %v368, %v357
        %v377 = vadd.f32 %v364, %v358
        %v378 = vadd.f32 %v368, %v359
        %v379 = vpack.c.bf16 %v373, %v371
        %v380 = vpack.c.bf16 %v374, %v372
        %v381 = vpack.c.bf16 %v377, %v375
        %v382 = vpack.c.bf16 %v378, %v376
        %v387 = vunpack.c.l.b16 %v379
        %v388 = vunpack.c.l.b16 %v380
        %v389 = vunpack.c.h.b16 %v379
        %v390 = vunpack.c.h.b16 %v380
        %v391 = vunpack.c.l.b16 %v381
        %v392 = vunpack.c.l.b16 %v382
        %v393 = vunpack.c.h.b16 %v381
        %v394 = vunpack.c.h.b16 %v382
        %v395 = vpack.c.b16 %v388, %v387
        %v396 = vpack.c.b16 %v390, %v389
        %v397 = vpack.c.b16 %v392, %v391
        %v398 = vpack.c.b16 %v394, %v393
        %403 = vst [vmem:[%s258] sm:$0xff] %v395
        %404 = vst [vmem:[%s258 + $0x8] sm:$0xff] %v396
        %405 = vst [vmem:[%s258 + $0x10] sm:$0xff] %v397
        %406 = vst [vmem:[%s258 + $0x18] sm:$0xff] %v398
        %s407 = sand.u32 %s125, 1
        %s408 = scalar_lea.sflag [#allocation4], %s407
        %s409 = sand.u32 %s125, 1
        %s410 = smul.addr %s409, 32
        %s411 = scalar_lea.vmem [#allocation7], %s410
        // Predicated region
        $region41: #{tpu_custom_call.1} parent=31 // pred_check
          %p412 = pneg %p135
        $region42: #{tpu_custom_call.1} parent=31 // pred_check_branch
          %414 = sbr.rel (%p412) target = $region44
        $region43: #{tpu_custom_call.1} parent=31 // pred_region
          %s415 = smul.u32 4, %s28
          %s417 = ssub.s32 512, 512
          %418 = vsyncadd %s408, %s417
          %s419 = smul.addr %s415, 2
          %s420 = smul.addr %s27, 8
          %s421 = sadd.s32 %s419, %s420
          %s422 = smul.addr %s421, 64
          %s423 = scalar_lea.hbm %s3, %s422
          %s424 = sshll.u32 %s411, 4
          %s425 = int_to_ptr.vmem [resolvable:$true] %s424
          %430 = dma.vmem_to_hbm [thread:$0]  %s425, 512, %s423, %s408, 128, 128, 8
        $region44: #{tpu_custom_call.1} parent=31 // pred_fallthru
          _
      $region32: #{tpu_custom_call.1} parent=5 // pred_fallthru
        _
      %p431 = scmp.le.s32.totalorder 2, %s18
      // Predicated region
      $region45: #{tpu_custom_call.1} parent=5 // pred_check
        %p432 = pneg %p431
      $region46: #{tpu_custom_call.1} parent=5 // pred_check_branch
        %434 = sbr.rel (%p432) target = $region48
      $region47: #{tpu_custom_call.1} parent=5 // pred_region
        %s435 = ssub.s32 %s18, 2
        // Predicated region
        $region49: #{tpu_custom_call.1} parent=47 // pred_check
          %p436 = pneg %p141
        $region50: #{tpu_custom_call.1} parent=47 // pred_check_branch
          %438 = sbr.rel (%p436) target = $region52
        $region51: #{tpu_custom_call.1} parent=47 // pred_region
          %s439 = sand.u32 %s126, 1
          %s440 = scalar_lea.sflag [#allocation4], %s439
          %s441 = sand.u32 %s126, 1
          %s442 = smul.addr %s441, 32
          %s443 = scalar_lea.vmem [#allocation7], %s442
          %444 = dma.done %s440, 512
        $region52: #{tpu_custom_call.1} parent=47 // pred_fallthru
          _
      $region48: #{tpu_custom_call.1} parent=5 // pred_fallthru
        _
    $region6: #{tpu_custom_call.1} parent=1 // loop_footer
      %s22 = sadd.s32 1, %s18
    $region7: #{tpu_custom_call.1} parent=1 // loop_footer_branch
      %17 = sbr.rel target = $region3
    $region8: #{tpu_custom_call.1} parent=1 // loop_exit
      _
    %445 = vsyncpa [#allocation3], 1
    %s446 = scalar_lea.sflag [#allocation3], 1
    %447 = vsyncpa %s446, 1
    %448 = vsyncpa [#allocation6], 1
    %s449 = scalar_lea.sflag [#allocation6], 1
    %450 = vsyncpa %s449, 1
    %451 = vsyncpa [#allocation4], 1
    %s452 = scalar_lea.sflag [#allocation4], 1
    %453 = vsyncpa %s452, 1

</llo_original>
